<compile_context>
chip_gen: v7x
topology: tpu7x:2x2x1
jax: 0.10.0
libtpu: 0.0.40
codegen_flags: <defaults>
</compile_context>

<pallas_src>
import math

import jax
import jax.numpy as jnp
from jax.experimental import pallas as pl
from jax.experimental.pallas import tpu as pltpu


_VMEM = pl.BlockSpec(memory_space=pltpu.MemorySpace.VMEM)


def _round_up(n, m):
    return -(-n // m) * m


# ---------------------------------------------------------------------------
# Kernel factory (shapes / slab offsets are static).
# ---------------------------------------------------------------------------
def make_noisy_dqn_kernel(in_f, n_act, hidden, batch):
    # Row offsets into the packed parameter slab (every row is `hidden` wide).
    o_w1 = 0                       # w1^T          : in_f rows
    o_sw1 = o_w1 + in_f            # sigma_w1^T    : in_f rows
    o_b1 = o_sw1 + in_f            # b1            : 1 row
    o_sb1 = o_b1 + 1               # sigma_b1      : 1 row
    o_w2 = o_sb1 + 1               # w2            : n_act rows
    o_sw2 = o_w2 + n_act           # sigma_w2      : n_act rows
    o_b2 = o_sw2 + n_act           # b2  (padded)  : 1 row
    o_sb2 = o_b2 + 1               # sigma_b2 (pad): 1 row

    # Row offsets into the packed noise slab.
    n_w1 = 0                       # eps_w1^T      : in_f rows
    n_b1 = n_w1 + in_f             # eps_b1        : 1 row
    n_w2 = n_b1 + 1                # eps_w2        : n_act rows
    n_b2 = n_w2 + n_act            # eps_b2        : 1 row (lanes 0:n_act)

    def kernel(x_ref, p_ref, e_ref, out_ref):
        x = x_ref[...]             # (batch, in_f) f32
        P = p_ref[...]             # (param_rows, hidden) f32
        E = e_ref[...]             # (noise_rows, hidden) f32

        # Effective (noisy) parameters, all lane-dense (rows, hidden).
        w1e = P[o_w1:o_w1 + in_f, :] + P[o_sw1:o_sw1 + in_f, :] * E[n_w1:n_w1 + in_f, :]
        b1e = P[o_b1:o_b1 + 1, :] + P[o_sb1:o_sb1 + 1, :] * E[n_b1:n_b1 + 1, :]
        w2e = P[o_w2:o_w2 + n_act, :] + P[o_sw2:o_sw2 + n_act, :] * E[n_w2:n_w2 + n_act, :]
        b2e = P[o_b2:o_b2 + 1, :] + P[o_sb2:o_sb2 + 1, :] * E[n_b2:n_b2 + 1, :]

        # Layer 1: K = in_f (CartPole obs = 4) is tiny -> static-unrolled
        # rank-1 broadcast-FMAs on the VPU instead of an almost-empty MXU pass.
        h = jnp.broadcast_to(b1e, (batch, hidden))
        for k in range(in_f):
            h = h + x[:, k:k + 1] * w1e[k:k + 1, :]
        h = jnp.maximum(h, 0.0)                            # ReLU

        # Layer 2: VPU multiply + cross-lane (XLU) reduce per action.  Keeps
        # everything lane-dense; never builds a (hidden, n_act) transposed
        # operand and the MXU would be <1% utilized at N = n_act anyway.
        cols = [jnp.sum(h * w2e[a:a + 1, :], axis=-1, keepdims=True)
                for a in range(n_act)]                     # n_act x (batch, 1)
        q = jnp.concatenate(cols, axis=-1)                 # (batch, n_act)
        out_ref[...] = q + b2e[:, 0:n_act]                 # single masked store

    return kernel


# ---------------------------------------------------------------------------
# One-time parameter packing (kernel layout; done at init/update time,
# NOT per forward call).
# ---------------------------------------------------------------------------
def pack_params(params):
    hidden, _ = params["w1"].shape
    n_act = params["w2"].shape[0]
    pad = hidden - n_act
    rows = [
        params["w1"].T.astype(jnp.float32),                    # (in_f, hidden)
        params["sigma_w1"].T.astype(jnp.float32),              # (in_f, hidden)
        params["b1"][None, :].astype(jnp.float32),             # (1, hidden)
        params["sigma_b1"][None, :].astype(jnp.float32),       # (1, hidden)
        params["w2"].astype(jnp.float32),                      # (n_act, hidden)
        params["sigma_w2"].astype(jnp.float32),                # (n_act, hidden)
        jnp.pad(params["b2"].astype(jnp.float32), (0, pad))[None, :],
        jnp.pad(params["sigma_b2"].astype(jnp.float32), (0, pad))[None, :],
    ]
    slab = jnp.concatenate(rows, axis=0)
    total = slab.shape[0]
    padded = _round_up(total, 8)
    if padded != total:
        slab = jnp.pad(slab, ((0, padded - total), (0, 0)))
    return slab


# ---------------------------------------------------------------------------
# Forward wrapper.
# ---------------------------------------------------------------------------
def noisy_dqn_forward(x, param_slab, noise_key, *, in_features, n_actions, hidden):
    """NoisyDQN forward.  Fresh epsilon ~ N(0,1) every call (epsilon.normal_())."""
    if x.dtype != jnp.float32:                 # mirrors x.float(); no-op skipped
        x = x.astype(jnp.float32)
    B = x.shape[0]

    noise_rows = _round_up(in_features + 1 + n_actions + 1, 8)
    eps = jax.random.normal(noise_key, (noise_rows, hidden), jnp.float32)

    kernel = make_noisy_dqn_kernel(in_features, n_actions, hidden, B)

    flops = (2 * B * hidden * (in_features + n_actions)         # both "matmuls"
             + 4 * hidden * (in_features + n_actions + 2))      # w + sigma*eps
    bytes_acc = 4 * (x.size + param_slab.size + eps.size + B * n_actions)
    cost = pl.CostEstimate(flops=int(flops), transcendentals=0,
                           bytes_accessed=int(bytes_acc))

    return pl.pallas_call(
        kernel,
        out_shape=jax.ShapeDtypeStruct((B, n_actions), jnp.float32),
        in_specs=[_VMEM, _VMEM, _VMEM],
        out_specs=_VMEM,
        cost_estimate=cost,
    )(x, param_slab, eps)


# ---------------------------------------------------------------------------
# Parameter construction (mirrors NoisyLinear.__init__ / reset_parameters).
# ---------------------------------------------------------------------------
def init_params(key, in_features, n_actions, hidden=512, sigma_init=0.017):
    k1, k2, k3, k4 = jax.random.split(key, 4)
    std1 = math.sqrt(3.0 / in_features)
    std2 = math.sqrt(3.0 / hidden)
    return {
        "w1": jax.random.uniform(k1, (hidden, in_features), jnp.float32, -std1, std1),
        "b1": jax.random.uniform(k2, (hidden,), jnp.float32, -std1, std1),
        "sigma_w1": jnp.full((hidden, in_features), sigma_init, jnp.float32),
        "sigma_b1": jnp.full((hidden,), sigma_init, jnp.float32),
        "w2": jax.random.uniform(k3, (n_actions, hidden), jnp.float32, -std2, std2),
        "b2": jax.random.uniform(k4, (n_actions,), jnp.float32, -std2, std2),
        "sigma_w2": jnp.full((n_actions, hidden), sigma_init, jnp.float32),
        "sigma_b2": jnp.full((n_actions,), sigma_init, jnp.float32),
    }


if __name__ == "__main__":
    # CartPole-like setup: observation dim 4, 2 actions, small batch.
    in_features, n_actions, hidden, batch = 4, 2, 512, 8

    root = jax.random.PRNGKey(0)
    k_params, k_x, k_noise_a, k_noise_b = jax.random.split(root, 4)

    params = init_params(k_params, in_features, n_actions, hidden)
    param_slab = jax.block_until_ready(pack_params(params))      # one-time pack
    x = jax.random.normal(k_x, (batch, in_features), jnp.float32)

    out_a = jax.block_until_ready(
        noisy_dqn_forward(x, param_slab, k_noise_a,
                          in_features=in_features, n_actions=n_actions,
                          hidden=hidden))

    # --- exact numerics: pure-JAX reference using the SAME noise slab --------
    noise_rows = _round_up(in_features + 1 + n_actions + 1, 8)
    eps = jax.random.normal(k_noise_a, (noise_rows, hidden), jnp.float32)
    ew1 = eps[0:in_features, :].T                       # (hidden, in_f)
    eb1 = eps[in_features, :]                           # (hidden,)
    ew2 = eps[in_features + 1:in_features + 1 + n_actions, :]   # (n_act, hidden)
    eb2 = eps[in_features + 1 + n_actions, :n_actions]          # (n_act,)

    w1_eff = params["w1"] + params["sigma_w1"] * ew1
    b1_eff = params["b1"] + params["sigma_b1"] * eb1
    h_ref = jnp.maximum(x @ w1_eff.T + b1_eff, 0.0)
    w2_eff = params["w2"] + params["sigma_w2"] * ew2
    b2_eff = params["b2"] + params["sigma_b2"] * eb2
    ref = h_ref @ w2_eff.T + b2_eff

    assert out_a.shape == (batch, n_actions)
    assert bool(jnp.all(jnp.isfinite(out_a)))
    assert jnp.allclose(out_a, ref, atol=1e-3, rtol=1e-3), (
        float(jnp.max(jnp.abs(out_a - ref))))

    # --- fresh noise each call: different key -> different Q-values ----------
    out_b = jax.block_until_ready(
        noisy_dqn_forward(x, param_slab, k_noise_b,
                          in_features=in_features, n_actions=n_actions,
                          hidden=hidden))
    assert not bool(jnp.allclose(out_a, out_b))

    # With sigma_init = 0.017 the noisy outputs stay near the noiseless forward.
    noiseless = (jnp.maximum(x @ params["w1"].T + params["b1"], 0.0)
                 @ params["w2"].T + params["b2"])
    assert bool(jnp.allclose(out_a, noiseless, atol=3.0))

    # TODO(synk): the PyTorch module's periodic host-side print of the
    # sigma-SNR (noisy_layers_sigma_snr every 500 calls) has no kernel
    # equivalent and is omitted.
    print("KERNEL_OK")
</pallas_src>

<mosaic_0001>
module attributes {stable_mosaic.version = 11 : i64} {
  func.func @kernel(%arg0: memref<8x4xf32, #tpu.memory_space<vmem>>, %arg1: memref<16x512xf32, #tpu.memory_space<vmem>>, %arg2: memref<8x512xf32, #tpu.memory_space<vmem>>, %arg3: memref<8x2xf32, #tpu.memory_space<vmem>>) attributes {dimension_semantics = [], scalar_prefetch = 0 : i64, scratch_operands = 0 : i64, tpu.core_type = #tpu.core_type<tc>} {
    %c0 = arith.constant 0 : index
    %c0_0 = arith.constant 0 : index
    %0 = vector.load %arg0[%c0, %c0_0] : memref<8x4xf32, #tpu.memory_space<vmem>>, vector<8x4xf32>
    %c0_1 = arith.constant 0 : index
    %c0_2 = arith.constant 0 : index
    %1 = vector.load %arg1[%c0_1, %c0_2] : memref<16x512xf32, #tpu.memory_space<vmem>>, vector<16x512xf32>
    %c0_3 = arith.constant 0 : index
    %c0_4 = arith.constant 0 : index
    %2 = vector.load %arg2[%c0_3, %c0_4] : memref<8x512xf32, #tpu.memory_space<vmem>>, vector<8x512xf32>
    %3 = vector.extract_strided_slice %1 {offsets = [0, 0], sizes = [4, 512], strides = [1, 1]} : vector<16x512xf32> to vector<4x512xf32>
    %4 = vector.extract_strided_slice %1 {offsets = [4, 0], sizes = [4, 512], strides = [1, 1]} : vector<16x512xf32> to vector<4x512xf32>
    %5 = vector.extract_strided_slice %2 {offsets = [0, 0], sizes = [4, 512], strides = [1, 1]} : vector<8x512xf32> to vector<4x512xf32>
    %6 = arith.mulf %4, %5 : vector<4x512xf32>
    %7 = arith.addf %3, %6 : vector<4x512xf32>
    %8 = vector.extract_strided_slice %1 {offsets = [8, 0], sizes = [1, 512], strides = [1, 1]} : vector<16x512xf32> to vector<1x512xf32>
    %9 = vector.extract_strided_slice %1 {offsets = [9, 0], sizes = [1, 512], strides = [1, 1]} : vector<16x512xf32> to vector<1x512xf32>
    %10 = vector.extract_strided_slice %2 {offsets = [4, 0], sizes = [1, 512], strides = [1, 1]} : vector<8x512xf32> to vector<1x512xf32>
    %11 = arith.mulf %9, %10 : vector<1x512xf32>
    %12 = arith.addf %8, %11 : vector<1x512xf32>
    %13 = vector.extract_strided_slice %1 {offsets = [10, 0], sizes = [2, 512], strides = [1, 1]} : vector<16x512xf32> to vector<2x512xf32>
    %14 = vector.extract_strided_slice %1 {offsets = [12, 0], sizes = [2, 512], strides = [1, 1]} : vector<16x512xf32> to vector<2x512xf32>
    %15 = vector.extract_strided_slice %2 {offsets = [5, 0], sizes = [2, 512], strides = [1, 1]} : vector<8x512xf32> to vector<2x512xf32>
    %16 = arith.mulf %14, %15 : vector<2x512xf32>
    %17 = arith.addf %13, %16 : vector<2x512xf32>
    %18 = vector.extract_strided_slice %1 {offsets = [14, 0], sizes = [1, 512], strides = [1, 1]} : vector<16x512xf32> to vector<1x512xf32>
    %19 = vector.extract_strided_slice %1 {offsets = [15, 0], sizes = [1, 512], strides = [1, 1]} : vector<16x512xf32> to vector<1x512xf32>
    %20 = vector.extract_strided_slice %2 {offsets = [7, 0], sizes = [1, 512], strides = [1, 1]} : vector<8x512xf32> to vector<1x512xf32>
    %21 = arith.mulf %19, %20 : vector<1x512xf32>
    %22 = arith.addf %18, %21 : vector<1x512xf32>
    %23 = vector.shape_cast %12 : vector<1x512xf32> to vector<1x512xf32>
    %24 = vector.broadcast %23 : vector<1x512xf32> to vector<8x512xf32>
    %25 = vector.extract_strided_slice %0 {offsets = [0, 0], sizes = [8, 1], strides = [1, 1]} : vector<8x4xf32> to vector<8x1xf32>
    %26 = vector.extract_strided_slice %7 {offsets = [0, 0], sizes = [1, 512], strides = [1, 1]} : vector<4x512xf32> to vector<1x512xf32>
    %27 = vector.broadcast %25 : vector<8x1xf32> to vector<8x512xf32>
    %28 = vector.broadcast %26 : vector<1x512xf32> to vector<8x512xf32>
    %29 = arith.mulf %27, %28 : vector<8x512xf32>
    %30 = arith.addf %24, %29 : vector<8x512xf32>
    %31 = vector.extract_strided_slice %0 {offsets = [0, 1], sizes = [8, 1], strides = [1, 1]} : vector<8x4xf32> to vector<8x1xf32>
    %32 = vector.extract_strided_slice %7 {offsets = [1, 0], sizes = [1, 512], strides = [1, 1]} : vector<4x512xf32> to vector<1x512xf32>
    %33 = vector.broadcast %31 : vector<8x1xf32> to vector<8x512xf32>
    %34 = vector.broadcast %32 : vector<1x512xf32> to vector<8x512xf32>
    %35 = arith.mulf %33, %34 : vector<8x512xf32>
    %36 = arith.addf %30, %35 : vector<8x512xf32>
    %37 = vector.extract_strided_slice %0 {offsets = [0, 2], sizes = [8, 1], strides = [1, 1]} : vector<8x4xf32> to vector<8x1xf32>
    %38 = vector.extract_strided_slice %7 {offsets = [2, 0], sizes = [1, 512], strides = [1, 1]} : vector<4x512xf32> to vector<1x512xf32>
    %39 = vector.broadcast %37 : vector<8x1xf32> to vector<8x512xf32>
    %40 = vector.broadcast %38 : vector<1x512xf32> to vector<8x512xf32>
    %41 = arith.mulf %39, %40 : vector<8x512xf32>
    %42 = arith.addf %36, %41 : vector<8x512xf32>
    %43 = vector.extract_strided_slice %0 {offsets = [0, 3], sizes = [8, 1], strides = [1, 1]} : vector<8x4xf32> to vector<8x1xf32>
    %44 = vector.extract_strided_slice %7 {offsets = [3, 0], sizes = [1, 512], strides = [1, 1]} : vector<4x512xf32> to vector<1x512xf32>
    %45 = vector.broadcast %43 : vector<8x1xf32> to vector<8x512xf32>
    %46 = vector.broadcast %44 : vector<1x512xf32> to vector<8x512xf32>
    %47 = arith.mulf %45, %46 : vector<8x512xf32>
    %48 = arith.addf %42, %47 : vector<8x512xf32>
    %cst = arith.constant 0.000000e+00 : f32
    %49 = vector.broadcast %cst : f32 to vector<8x512xf32>
    %50 = arith.maximumf %48, %49 : vector<8x512xf32>
    %51 = vector.extract_strided_slice %17 {offsets = [0, 0], sizes = [1, 512], strides = [1, 1]} : vector<2x512xf32> to vector<1x512xf32>
    %52 = vector.broadcast %51 : vector<1x512xf32> to vector<8x512xf32>
    %53 = arith.mulf %50, %52 : vector<8x512xf32>
    %cst_5 = arith.constant dense<0.000000e+00> : vector<8xf32>
    %54 = vector.multi_reduction <add>, %53, %cst_5 [1] : vector<8x512xf32> to vector<8xf32>
    %55 = vector.shape_cast %54 : vector<8xf32> to vector<8x1xf32>
    %56 = vector.extract_strided_slice %17 {offsets = [1, 0], sizes = [1, 512], strides = [1, 1]} : vector<2x512xf32> to vector<1x512xf32>
    %57 = vector.broadcast %56 : vector<1x512xf32> to vector<8x512xf32>
    %58 = arith.mulf %50, %57 : vector<8x512xf32>
    %cst_6 = arith.constant dense<0.000000e+00> : vector<8xf32>
    %59 = vector.multi_reduction <add>, %58, %cst_6 [1] : vector<8x512xf32> to vector<8xf32>
    %60 = vector.shape_cast %59 : vector<8xf32> to vector<8x1xf32>
    %61 = tpu.concatenate %55, %60 in 1 : vector<8x1xf32>, vector<8x1xf32> -> vector<8x2xf32>
    %62 = vector.extract_strided_slice %22 {offsets = [0, 0], sizes = [1, 2], strides = [1, 1]} : vector<1x512xf32> to vector<1x2xf32>
    %63 = vector.broadcast %62 : vector<1x2xf32> to vector<8x2xf32>
    %64 = arith.addf %61, %63 : vector<8x2xf32>
    %c0_7 = arith.constant 0 : index
    %c0_8 = arith.constant 0 : index
    %65 = vector.load %arg3[%c0_7, %c0_8] : memref<8x2xf32, #tpu.memory_space<vmem>>, vector<8x2xf32>
    tpu.vector_store %arg3[%c0_7, %c0_8], %64 {strides = array<i32>} : memref<8x2xf32, #tpu.memory_space<vmem>>, vector<8x2xf32>,
    return
  }
}

</mosaic_0001>

<llo_original>
// kernel: tpu_custom_call.1
$region0: #{tpu_custom_call.1}
  #allocation0 [shape = 'u32[]', space=smem, size = 0x4, offset = 0x4, fixed_abs, tag = 'smem constant byte address 0x4 - core index']
  #allocation1 [shape = 'u32[144,128]{1,0:T(1,128)}', space=vmem, size = 0x12000, scoped, tag = 'internal scratch']
  %s0 = inlined_call_operand.vmem [shape: f32[8,4], index: 0, kind: input, shape index: {}]
  %s1 = inlined_call_operand.hbm [shape: f32[16,512], index: 1, kind: input, shape index: {}]
  %s2 = inlined_call_operand.hbm [shape: f32[8,512], index: 2, kind: input, shape index: {}]
  %s3 = inlined_call_operand.vmem [shape: f32[8,2], index: 3, kind: output, shape index: {}]
  %s4 = sld [smem:[#allocation0]]
  $region30: #{tpu_custom_call.1} parent=0
    _
  %s6 = ssub.s32 1, %s4
  %s7 = scalar_select 0, %s6, %s4
  $region1: #{tpu_custom_call.1} parent=0
    #allocation2 [shape = 'u8[32768]{0}', space=vmem, size = 0x8000, scoped, tag = 'input window, operand 1, single buffered']
    #allocation3 [shape = 's32[1]{0}', space=sflag, size = 0x4, scoped, tag = 'scoped memory for tpu_custom_call.1']
    #allocation4 [shape = 'u8[16384]{0}', space=vmem, size = 0x4000, scoped, tag = 'input window, operand 2, single buffered']
    #allocation5 [shape = 's32[1]{0}', space=sflag, size = 0x4, scoped, tag = 'scoped memory for tpu_custom_call.1']
    %8 = vsyncpa [#allocation3], 0
    %9 = vsyncpa [#allocation5], 0
    // Predicated region
    $region2: #{tpu_custom_call.1} parent=1 // pred_check
      _
    $region3: #{tpu_custom_call.1} parent=1 // pred_check_branch
      %11 = sbr.rel (0) target = $region5
    $region4: #{tpu_custom_call.1} parent=1 // pred_region
      _
    $region5: #{tpu_custom_call.1} parent=1 // pred_fallthru
      _
    // Predicated region
    $region6: #{tpu_custom_call.1} parent=1 // pred_check
      _
    $region7: #{tpu_custom_call.1} parent=1 // pred_check_branch
      %13 = sbr.rel (0) target = $region9
    $region8: #{tpu_custom_call.1} parent=1 // pred_region
      %s15 = ssub.s32 1024, 1024
      %16 = vsyncadd [#allocation3], %s15
      %s17 = sshll.u32 [#allocation2], 4
      %s18 = int_to_ptr.vmem [resolvable:$true] %s17
      %23 = dma.hbm_to_vmem [thread:$0]  %s1, 1024, %s18, [#allocation3], 512, 512, 32
    $region9: #{tpu_custom_call.1} parent=1 // pred_fallthru
      _
    // Predicated region
    $region10: #{tpu_custom_call.1} parent=1 // pred_check
      _
    $region11: #{tpu_custom_call.1} parent=1 // pred_check_branch
      %25 = sbr.rel (0) target = $region13
    $region12: #{tpu_custom_call.1} parent=1 // pred_region
      %s27 = ssub.s32 512, 512
      %28 = vsyncadd [#allocation5], %s27
      %s30 = sshll.u32 [#allocation4], 4
      %s31 = int_to_ptr.vmem [resolvable:$true] %s30
      %33 = dma.hbm_to_vmem [thread:$0]  %s2, 512, %s31, [#allocation5]
    $region13: #{tpu_custom_call.1} parent=1 // pred_fallthru
      _
    // Predicated region
    $region14: #{tpu_custom_call.1} parent=1 // pred_check
      _
    $region15: #{tpu_custom_call.1} parent=1 // pred_check_branch
      %35 = sbr.rel (0) target = $region17
    $region16: #{tpu_custom_call.1} parent=1 // pred_region
      %36 = dma.done [#allocation3], 1024
    $region17: #{tpu_custom_call.1} parent=1 // pred_fallthru
      _
    // Predicated region
    $region18: #{tpu_custom_call.1} parent=1 // pred_check
      _
    $region19: #{tpu_custom_call.1} parent=1 // pred_check_branch
      %38 = sbr.rel (0) target = $region21
    $region20: #{tpu_custom_call.1} parent=1 // pred_region
      %39 = dma.done [#allocation5], 512
    $region21: #{tpu_custom_call.1} parent=1 // pred_fallthru
      _
    %v40 = vld [vmem:[%s0] sm:$0xff]
    %v41 = vld [vmem:[#allocation2] sm:$0xff]
    %v42 = vld [vmem:[#allocation2 + $0x8] sm:$0xff]
    %v43 = vld [vmem:[#allocation2 + $0x10] sm:$0xff]
    %v44 = vld [vmem:[#allocation2 + $0x18] sm:$0xff]
    %v45 = vld [vmem:[#allocation2 + $0x20] sm:$0xff]
    %v46 = vld [vmem:[#allocation2 + $0x28] sm:$0xff]
    %v47 = vld [vmem:[#allocation2 + $0x30] sm:$0xff]
    %v48 = vld [vmem:[#allocation2 + $0x38] sm:$0xff]
    %v49 = vld [vmem:[#allocation4] sm:$0xff]
    %v50 = vld [vmem:[#allocation4 + $0x8] sm:$0xff]
    %v51 = vld [vmem:[#allocation4 + $0x10] sm:$0xff]
    %v52 = vld [vmem:[#allocation4 + $0x18] sm:$0xff]
    %v57 = vrot.slane %v49, 4
    %v58 = vrot.slane %v50, 4
    %v59 = vrot.slane %v51, 4
    %v60 = vrot.slane %v52, 4
    %v65 = vmul.f32 %v41, %v57
    %v66 = vmul.f32 %v42, %v58
    %v67 = vmul.f32 %v43, %v59
    %v68 = vmul.f32 %v44, %v60
    %v73 = vrot.slane %v65, 4
    %v74 = vrot.slane %v66, 4
    %v75 = vrot.slane %v67, 4
    %v76 = vrot.slane %v68, 4
    %v81 = vadd.f32 %v41, %v73
    %v82 = vadd.f32 %v42, %v74
    %v83 = vadd.f32 %v43, %v75
    %v84 = vadd.f32 %v44, %v76
    %v85 = vrot.slane %v49, 3
    %v86 = vrot.slane %v50, 3
    %v87 = vrot.slane %v51, 3
    %v88 = vrot.slane %v52, 3
    %v93 = vmul.f32 %v45, %v85
    %v94 = vmul.f32 %v46, %v86
    %v95 = vmul.f32 %v47, %v87
    %v96 = vmul.f32 %v48, %v88
    %v101 = vrot.slane %v93, 1
    %v102 = vrot.slane %v94, 1
    %v103 = vrot.slane %v95, 1
    %v104 = vrot.slane %v96, 1
    %v109 = vadd.f32 %v45, %v101
    %v110 = vadd.f32 %v46, %v102
    %v111 = vadd.f32 %v47, %v103
    %v112 = vadd.f32 %v48, %v104
    %v113 = vrot.slane %v49, 1
    %v114 = vrot.slane %v50, 1
    %v115 = vrot.slane %v51, 1
    %v116 = vrot.slane %v52, 1
    %v121 = vmul.f32 %v45, %v113
    %v122 = vmul.f32 %v46, %v114
    %v123 = vmul.f32 %v47, %v115
    %v124 = vmul.f32 %v48, %v116
    %v129 = vrot.slane %v121, 2
    %v130 = vrot.slane %v122, 2
    %v131 = vrot.slane %v123, 2
    %v132 = vrot.slane %v124, 2
    %v137 = vadd.f32 %v45, %v129
    %v138 = vadd.f32 %v46, %v130
    %v139 = vadd.f32 %v47, %v131
    %v140 = vadd.f32 %v48, %v132
    %v141 = vmul.f32 %v45, %v49
    %v143 = vrot.slane %v141, 1
    %v145 = vadd.f32 %v45, %v143
    %v146 = vlaneseq
    %v147 = vshrl.u32 %v146, 7
    %v148 = vsub.s32 0, %v147
    %v149 = vrot.slane %v109, %v148
    %v150 = vlaneseq
    %v151 = vshrl.u32 %v150, 7
    %v152 = vsub.s32 0, %v151
    %v153 = vrot.slane %v110, %v152
    %v154 = vlaneseq
    %v155 = vshrl.u32 %v154, 7
    %v156 = vsub.s32 0, %v155
    %v157 = vrot.slane %v111, %v156
    %v158 = vlaneseq
    %v159 = vshrl.u32 %v158, 7
    %v160 = vsub.s32 0, %v159
    %v161 = vrot.slane %v112, %v160
    %163 = vset.pattern.permute.xlu0 0
    %164 = vperm.xlu0 %163, %v40
    %v165 = vpop.permute.xlu0 %164
    %v167 = vlaneseq
    %v168 = vshrl.u32 %v167, 7
    %v169 = vsub.s32 0, %v168
    %v170 = vrot.slane %v81, %v169
    %v171 = vlaneseq
    %v172 = vshrl.u32 %v171, 7
    %v173 = vsub.s32 0, %v172
    %v174 = vrot.slane %v82, %v173
    %v175 = vlaneseq
    %v176 = vshrl.u32 %v175, 7
    %v177 = vsub.s32 0, %v176
    %v178 = vrot.slane %v83, %v177
    %v179 = vlaneseq
    %v180 = vshrl.u32 %v179, 7
    %v181 = vsub.s32 0, %v180
    %v182 = vrot.slane %v84, %v181
    %v183 = vmul.f32 %v165, %v170
    %v184 = vmul.f32 %v165, %v174
    %v185 = vmul.f32 %v165, %v178
    %v186 = vmul.f32 %v165, %v182
    %v187 = vadd.f32 %v149, %v183
    %v188 = vadd.f32 %v153, %v184
    %v189 = vadd.f32 %v157, %v185
    %v190 = vadd.f32 %v161, %v186
    %191 = vset.pattern.permute.xlu0 1
    %192 = vperm.xlu0 %191, %v40
    %v193 = vpop.permute.xlu0 %192
    %v195 = vlaneseq
    %v196 = vshrl.u32 %v195, 7
    %v197 = vsub.s32 1, %v196
    %v198 = vrot.slane %v81, %v197
    %v199 = vlaneseq
    %v200 = vshrl.u32 %v199, 7
    %v201 = vsub.s32 1, %v200
    %v202 = vrot.slane %v82, %v201
    %v203 = vlaneseq
    %v204 = vshrl.u32 %v203, 7
    %v205 = vsub.s32 1, %v204
    %v206 = vrot.slane %v83, %v205
    %v207 = vlaneseq
    %v208 = vshrl.u32 %v207, 7
    %v209 = vsub.s32 1, %v208
    %v210 = vrot.slane %v84, %v209
    %v211 = vmul.f32 %v193, %v198
    %v212 = vmul.f32 %v193, %v202
    %v213 = vmul.f32 %v193, %v206
    %v214 = vmul.f32 %v193, %v210
    %v215 = vadd.f32 %v187, %v211
    %v216 = vadd.f32 %v188, %v212
    %v217 = vadd.f32 %v189, %v213
    %v218 = vadd.f32 %v190, %v214
    %219 = vset.pattern.permute.xlu0 2
    %220 = vperm.xlu0 %219, %v40
    %v221 = vpop.permute.xlu0 %220
    %v223 = vlaneseq
    %v224 = vshrl.u32 %v223, 7
    %v225 = vsub.s32 2, %v224
    %v226 = vrot.slane %v81, %v225
    %v227 = vlaneseq
    %v228 = vshrl.u32 %v227, 7
    %v229 = vsub.s32 2, %v228
    %v230 = vrot.slane %v82, %v229
    %v231 = vlaneseq
    %v232 = vshrl.u32 %v231, 7
    %v233 = vsub.s32 2, %v232
    %v234 = vrot.slane %v83, %v233
    %v235 = vlaneseq
    %v236 = vshrl.u32 %v235, 7
    %v237 = vsub.s32 2, %v236
    %v238 = vrot.slane %v84, %v237
    %v239 = vmul.f32 %v221, %v226
    %v240 = vmul.f32 %v221, %v230
    %v241 = vmul.f32 %v221, %v234
    %v242 = vmul.f32 %v221, %v238
    %v243 = vadd.f32 %v215, %v239
    %v244 = vadd.f32 %v216, %v240
    %v245 = vadd.f32 %v217, %v241
    %v246 = vadd.f32 %v218, %v242
    %247 = vset.pattern.permute.xlu0 3
    %248 = vperm.xlu0 %247, %v40
    %v249 = vpop.permute.xlu0 %248
    %v251 = vlaneseq
    %v252 = vshrl.u32 %v251, 7
    %v253 = vsub.s32 3, %v252
    %v254 = vrot.slane %v81, %v253
    %v255 = vlaneseq
    %v256 = vshrl.u32 %v255, 7
    %v257 = vsub.s32 3, %v256
    %v258 = vrot.slane %v82, %v257
    %v259 = vlaneseq
    %v260 = vshrl.u32 %v259, 7
    %v261 = vsub.s32 3, %v260
    %v262 = vrot.slane %v83, %v261
    %v263 = vlaneseq
    %v264 = vshrl.u32 %v263, 7
    %v265 = vsub.s32 3, %v264
    %v266 = vrot.slane %v84, %v265
    %v267 = vmul.f32 %v249, %v254
    %v268 = vmul.f32 %v249, %v258
    %v269 = vmul.f32 %v249, %v262
    %v270 = vmul.f32 %v249, %v266
    %v271 = vadd.f32 %v243, %v267
    %v272 = vadd.f32 %v244, %v268
    %v273 = vadd.f32 %v245, %v269
    %v274 = vadd.f32 %v246, %v270
    %v275 = vmax.f32 %v271, 0.0
    %v276 = vmax.f32 %v272, 0.0
    %v277 = vmax.f32 %v273, 0.0
    %v278 = vmax.f32 %v274, 0.0
    %v279 = vlaneseq
    %v280 = vshrl.u32 %v279, 7
    %v281 = vsub.s32 2, %v280
    %v282 = vrot.slane %v137, %v281
    %v283 = vlaneseq
    %v284 = vshrl.u32 %v283, 7
    %v285 = vsub.s32 2, %v284
    %v286 = vrot.slane %v138, %v285
    %v287 = vlaneseq
    %v288 = vshrl.u32 %v287, 7
    %v289 = vsub.s32 2, %v288
    %v290 = vrot.slane %v139, %v289
    %v291 = vlaneseq
    %v292 = vshrl.u32 %v291, 7
    %v293 = vsub.s32 2, %v292
    %v294 = vrot.slane %v140, %v293
    %v295 = vmul.f32 %v275, %v282
    %v296 = vmul.f32 %v276, %v286
    %v297 = vmul.f32 %v277, %v290
    %v298 = vmul.f32 %v278, %v294
    %v299 = vadd.f32 %v295, %v296
    %v300 = vadd.f32 %v299, %v297
    %v301 = vadd.f32 %v300, %v298
    %302 = vadd.xlane.f32.xlu0 %v301
    %v303 = vpop.xlane.xlu0 %302
    %v304 = vlaneseq
    %v305 = vshrl.u32 %v304, 7
    %v306 = vsub.s32 3, %v305
    %v307 = vrot.slane %v137, %v306
    %v308 = vlaneseq
    %v309 = vshrl.u32 %v308, 7
    %v310 = vsub.s32 3, %v309
    %v311 = vrot.slane %v138, %v310
    %v312 = vlaneseq
    %v313 = vshrl.u32 %v312, 7
    %v314 = vsub.s32 3, %v313
    %v315 = vrot.slane %v139, %v314
    %v316 = vlaneseq
    %v317 = vshrl.u32 %v316, 7
    %v318 = vsub.s32 3, %v317
    %v319 = vrot.slane %v140, %v318
    %v320 = vmul.f32 %v275, %v307
    %v321 = vmul.f32 %v276, %v311
    %v322 = vmul.f32 %v277, %v315
    %v323 = vmul.f32 %v278, %v319
    %v324 = vadd.f32 %v320, %v321
    %v325 = vadd.f32 %v324, %v322
    %v326 = vadd.f32 %v325, %v323
    %327 = vadd.xlane.f32.xlu0 %v326
    %v328 = vpop.xlane.xlu0 %327
    %vm329 = vcmask 7168
    %v330 = vsel %vm329, %v303, %v328
    %v331 = vlaneseq
    %v332 = vshrl.u32 %v331, 7
    %v333 = vsub.s32 6, %v332
    %v334 = vrot.slane %v145, %v333
    %v335 = vadd.f32 %v330, %v334
    %vm336 = vcmask 15360
    %337 = vst.msk [vmem:[%s3] sm:$0xff] %vm336, %v335
    // Predicated region
    $region22: #{tpu_custom_call.1} parent=1 // pred_check
      _
    $region23: #{tpu_custom_call.1} parent=1 // pred_check_branch
      %339 = sbr.rel (0) target = $region25
    $region24: #{tpu_custom_call.1} parent=1 // pred_region
      _
    $region25: #{tpu_custom_call.1} parent=1 // pred_fallthru
      _
    // Predicated region
    $region26: #{tpu_custom_call.1} parent=1 // pred_check
      _
    $region27: #{tpu_custom_call.1} parent=1 // pred_check_branch
      %341 = sbr.rel (0) target = $region29
    $region28: #{tpu_custom_call.1} parent=1 // pred_region
      _
    $region29: #{tpu_custom_call.1} parent=1 // pred_fallthru
      _
    %342 = vsyncpa [#allocation3], 1
    %343 = vsyncpa [#allocation5], 1

</llo_original>
